<compile_context>
chip_gen: v7x
topology: tpu7x:2x2x1
jax: 0.10.0
libtpu: 0.0.40
codegen_flags: <defaults>
</compile_context>

<pallas_src>
import functools

import jax
import jax.numpy as jnp
from jax.experimental import pallas as pl


# ----------------------------- Pallas kernel --------------------------------

def _fgf_kernel(bh_ref, bw_ref, uh_ref, uwT_ref, invn_ref,
                lrx_ref, lry_ref, hrx_ref, out_ref, *, eps, c_rep, nhl, nhh):
    x = lrx_ref[...].astype(jnp.float32)       # (N*HL, cx*WL)
    y = lry_ref[...].astype(jnp.float32)       # (N*HL, C*WL)
    hrx = hrx_ref[...].astype(jnp.float32)     # (N*HH, cx*WH)
    inv_n = invn_ref[...]                      # (N*HL, C*WL) precomputed 1/counts

    if c_rep > 1:
        # single-channel guidance: broadcast along the lane (channel) axis
        # in-register instead of materializing C copies in HBM.
        x = jnp.tile(x, (1, c_rep))            # (N*HL, C*WL)
        hrx = jnp.tile(hrx, (1, c_rep))        # (N*HH, C*WH)

    # All four moment planes stacked on the sublane axis -> one pair of matmuls.
    cat = jnp.concatenate([x, y, x * y, x * x], axis=0)      # (4*N*HL, C*WL)
    bs = jnp.dot(bh_ref[...],                                 # blockdiag_{4N}(B_h)
                 jnp.dot(cat, bw_ref[...],                    # blockdiag_C(B_w)
                         preferred_element_type=jnp.float32),
                 preferred_element_type=jnp.float32)          # (4*N*HL, C*WL)

    # sublane-aligned row slices (multiples of N*HL)
    mean_x = bs[0 * nhl:1 * nhl] * inv_n
    mean_y = bs[1 * nhl:2 * nhl] * inv_n
    cov_xy = bs[2 * nhl:3 * nhl] * inv_n - mean_x * mean_y
    var_x = bs[3 * nhl:4 * nhl] * inv_n - mean_x * mean_x

    d = var_x + eps
    rcp = pl.reciprocal(d, approx=True)
    rcp = rcp * (2.0 - d * rcp)                # one Newton step -> f32 accuracy
    A = cov_xy * rcp
    b = mean_y - A * mean_x

    # Bilinear upsample of [A; b] (stacked on sublanes) in 2 matmuls.
    ab = jnp.concatenate([A, b], axis=0)                      # (2*N*HL, C*WL)
    up = jnp.dot(uh_ref[...],                                 # blockdiag_{2N}(U_h)
                 jnp.dot(ab, uwT_ref[...],                    # blockdiag_C(U_w^T)
                         preferred_element_type=jnp.float32),
                 preferred_element_type=jnp.float32)          # (2*N*HH, C*WH)

    out_ref[...] = (up[:nhh] * hrx + up[nhh:]).astype(out_ref.dtype)


# ----------------------------- glue / wrapper --------------------------------

def _box_matrix(n, r):
    idx = jnp.arange(n)
    return (jnp.abs(idx[:, None] - idx[None, :]) <= r).astype(jnp.float32)


def _bilinear_matrix(n_out, n_in):
    # align_corners=True interpolation matrix, shape (n_out, n_in)
    if n_out == 1:
        s = jnp.zeros((1,), jnp.float32)
    else:
        s = jnp.arange(n_out, dtype=jnp.float32) * (n_in - 1) / (n_out - 1)
    i0 = jnp.clip(jnp.floor(s).astype(jnp.int32), 0, n_in - 1)
    i1 = jnp.clip(i0 + 1, 0, n_in - 1)
    w1 = s - i0.astype(jnp.float32)
    w0 = 1.0 - w1
    m = jnp.zeros((n_out, n_in), jnp.float32)
    m = m.at[jnp.arange(n_out), i0].add(w0)
    m = m.at[jnp.arange(n_out), i1].add(w1)
    return m


def _window_counts(n, r):
    i = jnp.arange(n)
    lo = jnp.maximum(i - r, 0)
    hi = jnp.minimum(i + r, n - 1)
    return (hi - lo + 1).astype(jnp.float32)


def _pack_nchw(x):
    # (N, C, H, W) -> (N*H, C*W): batch+rows on sublanes, channels on lanes.
    n, c, h, w = x.shape
    return jnp.transpose(x, (0, 2, 1, 3)).reshape(n * h, c * w)


def fast_guided_filter(lr_x, lr_y, hr_x, r=2, eps=1e-8):
    n, c_x, hl, wl = lr_x.shape
    ny, c, hly, wly = lr_y.shape
    nh, c_hx, hh, wh = hr_x.shape
    assert n == ny and ny == nh, "Batch sizes must match"
    assert c_x == c_hx and (c_x == 1 or c_x == c), "Invalid channel dimensions"
    assert hl == hly and wl == wly, "Low-res dimensions must match"
    assert hl > 2 * r + 1 and wl > 2 * r + 1, "Low-res size too small for radius"

    cwh = c * wh
    nhl, nhh = n * hl, n * hh

    # Grid-invariant operators (built once in the wrapper, fetched once).
    bh = jnp.kron(jnp.eye(4 * n, dtype=jnp.float32), _box_matrix(hl, r))
    bw = jnp.kron(jnp.eye(c, dtype=jnp.float32), _box_matrix(wl, r))
    uh = jnp.kron(jnp.eye(2 * n, dtype=jnp.float32), _bilinear_matrix(hh, hl))
    uwT = jnp.kron(jnp.eye(c, dtype=jnp.float32), _bilinear_matrix(wh, wl).T)
    inv_n = 1.0 / (_window_counts(hl, r)[:, None] *
                   _window_counts(wl, r)[None, :])             # (HL, WL)
    inv_n = jnp.tile(inv_n, (n, c))                            # (N*HL, C*WL)

    lrx_p = _pack_nchw(lr_x)                                   # (N*HL, cx*WL)
    lry_p = _pack_nchw(lr_y)                                   # (N*HL, C*WL)
    hrx_p = _pack_nchw(hr_x)                                   # (N*HH, cx*WH)

    kernel = functools.partial(_fgf_kernel, eps=eps, c_rep=c // c_x,
                               nhl=nhl, nhh=nhh)

    # Single-shot (no grid): all operands comfortably fit VMEM at low-res
    # sizes, so there is no per-grid-step overhead and no double-buffering.
    out_p = pl.pallas_call(
        kernel,
        out_shape=jax.ShapeDtypeStruct((nhh, cwh), hr_x.dtype),
    )(bh, bw, uh, uwT, inv_n, lrx_p, lry_p, hrx_p)

    # (N*HH, C*WH) -> (N, C, HH, WH)
    return jnp.transpose(out_p.reshape(n, hh, c, wh), (0, 2, 1, 3))


# ----------------------------- pure-JAX reference ----------------------------

def _boxfilter_ref(x, r):
    # mirrors the PyTorch BoxFilter (cumsum + diff, clamped windows)
    cs = jnp.cumsum(x, axis=2)
    left = cs[:, :, r:2 * r + 1]
    middle = cs[:, :, 2 * r + 1:] - cs[:, :, :-2 * r - 1]
    right = cs[:, :, -1:] - cs[:, :, -2 * r - 1:-r - 1]
    x = jnp.concatenate([left, middle, right], axis=2)
    cs = jnp.cumsum(x, axis=3)
    left = cs[:, :, :, r:2 * r + 1]
    middle = cs[:, :, :, 2 * r + 1:] - cs[:, :, :, :-2 * r - 1]
    right = cs[:, :, :, -1:] - cs[:, :, :, -2 * r - 1:-r - 1]
    return jnp.concatenate([left, middle, right], axis=3)


def _bilinear_ref(x, hh, wh):
    _, _, hl, wl = x.shape
    ys = jnp.arange(hh, dtype=jnp.float32) * (hl - 1) / (hh - 1)
    xs = jnp.arange(wh, dtype=jnp.float32) * (wl - 1) / (wh - 1)
    y0 = jnp.floor(ys).astype(jnp.int32)
    y1 = jnp.minimum(y0 + 1, hl - 1)
    wy = (ys - y0.astype(jnp.float32))[:, None]
    x0 = jnp.floor(xs).astype(jnp.int32)
    x1 = jnp.minimum(x0 + 1, wl - 1)
    wx = xs - x0.astype(jnp.float32)
    top = x[:, :, y0][:, :, :, x0] * (1 - wx) + x[:, :, y0][:, :, :, x1] * wx
    bot = x[:, :, y1][:, :, :, x0] * (1 - wx) + x[:, :, y1][:, :, :, x1] * wx
    return top * (1 - wy) + bot * wy


def _fgf_ref(lr_x, lr_y, hr_x, r, eps):
    _, _, hl, wl = lr_x.shape
    _, _, hh, wh = hr_x.shape
    n_cnt = _boxfilter_ref(jnp.ones((1, 1, hl, wl), jnp.float32), r)
    mean_x = _boxfilter_ref(lr_x, r) / n_cnt
    mean_y = _boxfilter_ref(lr_y, r) / n_cnt
    cov_xy = _boxfilter_ref(lr_x * lr_y, r) / n_cnt - mean_x * mean_y
    var_x = _boxfilter_ref(lr_x * lr_x, r) / n_cnt - mean_x * mean_x
    A = cov_xy / (var_x + eps)
    b = mean_y - A * mean_x
    return _bilinear_ref(A, hh, wh) * hr_x + _bilinear_ref(b, hh, wh)


# --------------------------------- main --------------------------------------

if __name__ == "__main__":
    r, eps = 2, 1e-8
    N, C, HL, WL, HH, WH = 2, 4, 16, 16, 32, 32

    key = jax.random.PRNGKey(0)
    k1, k2, k3 = jax.random.split(key, 3)
    lr_x = jax.random.uniform(k1, (N, C, HL, WL), jnp.float32)
    lr_y = jax.random.uniform(k2, (N, C, HL, WL), jnp.float32)
    hr_x = jax.random.uniform(k3, (N, C, HH, WH), jnp.float32)

    out = jax.block_until_ready(fast_guided_filter(lr_x, lr_y, hr_x, r=r, eps=eps))
    ref = _fgf_ref(lr_x, lr_y, hr_x, r, eps)
    assert out.shape == (N, C, HH, WH)
    assert bool(jnp.allclose(out, ref, atol=1e-4, rtol=1e-4)), "mismatch vs reference"

    # single-channel guidance broadcasting case (c_lrx == 1, c_lry == C)
    lr_x1 = lr_x[:, :1]
    hr_x1 = hr_x[:, :1]
    out1 = jax.block_until_ready(fast_guided_filter(lr_x1, lr_y, hr_x1, r=r, eps=eps))
    ref1 = _fgf_ref(lr_x1, lr_y, hr_x1, r, eps)
    assert out1.shape == (N, C, HH, WH)
    assert bool(jnp.allclose(out1, ref1, atol=1e-4, rtol=1e-4)), "mismatch (c=1 case)"

    print("KERNEL_OK")
</pallas_src>

<mosaic_0001>
module attributes {stable_mosaic.version = 11 : i64} {
  func.func @_fgf_kernel(%arg0: memref<128x128xf32, #tpu.memory_space<vmem>>, %arg1: memref<64x64xf32, #tpu.memory_space<vmem>>, %arg2: memref<128x64xf32, #tpu.memory_space<vmem>>, %arg3: memref<64x128xf32, #tpu.memory_space<vmem>>, %arg4: memref<32x64xf32, #tpu.memory_space<vmem>>, %arg5: memref<32x64xf32, #tpu.memory_space<vmem>>, %arg6: memref<32x64xf32, #tpu.memory_space<vmem>>, %arg7: memref<64x128xf32, #tpu.memory_space<vmem>>, %arg8: memref<64x128xf32, #tpu.memory_space<vmem>>) attributes {dimension_semantics = [], scalar_prefetch = 0 : i64, scratch_operands = 0 : i64, tpu.core_type = #tpu.core_type<tc>} {
    %c0 = arith.constant 0 : index
    %c0_0 = arith.constant 0 : index
    %0 = vector.load %arg5[%c0, %c0_0] : memref<32x64xf32, #tpu.memory_space<vmem>>, vector<32x64xf32>
    %c0_1 = arith.constant 0 : index
    %c0_2 = arith.constant 0 : index
    %1 = vector.load %arg6[%c0_1, %c0_2] : memref<32x64xf32, #tpu.memory_space<vmem>>, vector<32x64xf32>
    %c0_3 = arith.constant 0 : index
    %c0_4 = arith.constant 0 : index
    %2 = vector.load %arg7[%c0_3, %c0_4] : memref<64x128xf32, #tpu.memory_space<vmem>>, vector<64x128xf32>
    %c0_5 = arith.constant 0 : index
    %c0_6 = arith.constant 0 : index
    %3 = vector.load %arg4[%c0_5, %c0_6] : memref<32x64xf32, #tpu.memory_space<vmem>>, vector<32x64xf32>
    %4 = arith.mulf %0, %1 : vector<32x64xf32>
    %5 = arith.mulf %0, %0 : vector<32x64xf32>
    %6 = tpu.concatenate %0, %1, %4, %5 in 0 : vector<32x64xf32>, vector<32x64xf32>, vector<32x64xf32>, vector<32x64xf32> -> vector<128x64xf32>
    %c0_7 = arith.constant 0 : index
    %c0_8 = arith.constant 0 : index
    %7 = vector.load %arg0[%c0_7, %c0_8] : memref<128x128xf32, #tpu.memory_space<vmem>>, vector<128x128xf32>
    %c0_9 = arith.constant 0 : index
    %c0_10 = arith.constant 0 : index
    %8 = vector.load %arg1[%c0_9, %c0_10] : memref<64x64xf32, #tpu.memory_space<vmem>>, vector<64x64xf32>
    %cst = arith.constant dense<0.000000e+00> : vector<128x64xf32>
    %9 = tpu.matmul %6, %8, %cst {dimension_numbers = #tpu.dot_dimension_numbers<[1], [0], [0], [1], [0, 0, 1, 1], [], []>} : vector<128x64xf32>, vector<64x64xf32>, vector<128x64xf32> -> vector<128x64xf32>
    %cst_11 = arith.constant dense<0.000000e+00> : vector<128x64xf32>
    %10 = tpu.matmul %7, %9, %cst_11 {dimension_numbers = #tpu.dot_dimension_numbers<[1], [0], [0], [1], [0, 0, 1, 1], [], []>} : vector<128x128xf32>, vector<128x64xf32>, vector<128x64xf32> -> vector<128x64xf32>
    %11 = vector.extract_strided_slice %10 {offsets = [0, 0], sizes = [32, 64], strides = [1, 1]} : vector<128x64xf32> to vector<32x64xf32>
    %12 = arith.mulf %11, %3 : vector<32x64xf32>
    %13 = vector.extract_strided_slice %10 {offsets = [32, 0], sizes = [32, 64], strides = [1, 1]} : vector<128x64xf32> to vector<32x64xf32>
    %14 = arith.mulf %13, %3 : vector<32x64xf32>
    %15 = vector.extract_strided_slice %10 {offsets = [64, 0], sizes = [32, 64], strides = [1, 1]} : vector<128x64xf32> to vector<32x64xf32>
    %16 = arith.mulf %15, %3 : vector<32x64xf32>
    %17 = arith.mulf %12, %14 : vector<32x64xf32>
    %18 = arith.subf %16, %17 : vector<32x64xf32>
    %19 = vector.extract_strided_slice %10 {offsets = [96, 0], sizes = [32, 64], strides = [1, 1]} : vector<128x64xf32> to vector<32x64xf32>
    %20 = arith.mulf %19, %3 : vector<32x64xf32>
    %21 = arith.mulf %12, %12 : vector<32x64xf32>
    %22 = arith.subf %20, %21 : vector<32x64xf32>
    %cst_12 = arith.constant 9.99999993E-9 : f32
    %23 = vector.broadcast %cst_12 : f32 to vector<32x64xf32>
    %24 = arith.addf %22, %23 : vector<32x64xf32>
    %25 = tpu.reciprocal %24 {approx = true} : vector<32x64xf32> -> vector<32x64xf32>
    %26 = arith.mulf %24, %25 : vector<32x64xf32>
    %cst_13 = arith.constant 2.000000e+00 : f32
    %27 = vector.broadcast %cst_13 : f32 to vector<32x64xf32>
    %28 = arith.subf %27, %26 : vector<32x64xf32>
    %29 = arith.mulf %25, %28 : vector<32x64xf32>
    %30 = arith.mulf %18, %29 : vector<32x64xf32>
    %31 = arith.mulf %30, %12 : vector<32x64xf32>
    %32 = arith.subf %14, %31 : vector<32x64xf32>
    %33 = tpu.concatenate %30, %32 in 0 : vector<32x64xf32>, vector<32x64xf32> -> vector<64x64xf32>
    %c0_14 = arith.constant 0 : index
    %c0_15 = arith.constant 0 : index
    %34 = vector.load %arg2[%c0_14, %c0_15] : memref<128x64xf32, #tpu.memory_space<vmem>>, vector<128x64xf32>
    %c0_16 = arith.constant 0 : index
    %c0_17 = arith.constant 0 : index
    %35 = vector.load %arg3[%c0_16, %c0_17] : memref<64x128xf32, #tpu.memory_space<vmem>>, vector<64x128xf32>
    %cst_18 = arith.constant dense<0.000000e+00> : vector<64x128xf32>
    %36 = tpu.matmul %33, %35, %cst_18 {dimension_numbers = #tpu.dot_dimension_numbers<[1], [0], [0], [1], [0, 0, 1, 1], [], []>} : vector<64x64xf32>, vector<64x128xf32>, vector<64x128xf32> -> vector<64x128xf32>
    %cst_19 = arith.constant dense<0.000000e+00> : vector<128x128xf32>
    %37 = tpu.matmul %34, %36, %cst_19 {dimension_numbers = #tpu.dot_dimension_numbers<[1], [0], [0], [1], [0, 0, 1, 1], [], []>} : vector<128x64xf32>, vector<64x128xf32>, vector<128x128xf32> -> vector<128x128xf32>
    %38 = vector.extract_strided_slice %37 {offsets = [0, 0], sizes = [64, 128], strides = [1, 1]} : vector<128x128xf32> to vector<64x128xf32>
    %39 = arith.mulf %38, %2 : vector<64x128xf32>
    %40 = vector.extract_strided_slice %37 {offsets = [64, 0], sizes = [64, 128], strides = [1, 1]} : vector<128x128xf32> to vector<64x128xf32>
    %41 = arith.addf %39, %40 : vector<64x128xf32>
    %c0_20 = arith.constant 0 : index
    %c0_21 = arith.constant 0 : index
    %42 = vector.load %arg8[%c0_20, %c0_21] : memref<64x128xf32, #tpu.memory_space<vmem>>, vector<64x128xf32>
    tpu.vector_store %arg8[%c0_20, %c0_21], %41 {strides = array<i32>} : memref<64x128xf32, #tpu.memory_space<vmem>>, vector<64x128xf32>,
    return
  }
}

</mosaic_0001>

<llo_original>
// kernel: tpu_custom_call.1
$region0: #{tpu_custom_call.1}
  #allocation0 [shape = 'u32[]', space=smem, size = 0x4, offset = 0x4, fixed_abs, tag = 'smem constant byte address 0x4 - core index']
  #allocation1 [shape = 'u32[144,128]{1,0:T(1,128)}', space=vmem, size = 0x12000, scoped, tag = 'internal scratch']
  %s0 = inlined_call_operand.vmem [shape: f32[128,128], index: 0, kind: input, shape index: {}]
  %s1 = inlined_call_operand.vmem [shape: f32[64,64], index: 1, kind: input, shape index: {}]
  %s2 = inlined_call_operand.vmem [shape: f32[128,64], index: 2, kind: input, shape index: {}]
  %s3 = inlined_call_operand.hbm [shape: f32[64,128], index: 3, kind: input, shape index: {}]
  %s4 = inlined_call_operand.hbm [shape: f32[32,64], index: 4, kind: input, shape index: {}]
  %s5 = inlined_call_operand.hbm [shape: f32[32,64], index: 5, kind: input, shape index: {}]
  %s6 = inlined_call_operand.hbm [shape: f32[32,64], index: 6, kind: input, shape index: {}]
  %s7 = inlined_call_operand.hbm [shape: f32[64,128], index: 7, kind: input, shape index: {}]
  %s8 = inlined_call_operand.hbm [shape: f32[64,128], index: 8, kind: output, shape index: {}]
  %s9 = sld [smem:[#allocation0]]
  $region62: #{tpu_custom_call.1} parent=0
    _
  %s11 = ssub.s32 1, %s9
  %s12 = scalar_select 0, %s11, %s9
  $region1: #{tpu_custom_call.1} parent=0
    #allocation2 [shape = 'u8[32768]{0}', space=vmem, size = 0x8000, scoped, tag = 'input window, operand 3, single buffered']
    #allocation3 [shape = 's32[1]{0}', space=sflag, size = 0x4, scoped, tag = 'scoped memory for tpu_custom_call.1']
    #allocation4 [shape = 's32[1]{0}', space=sflag, size = 0x4, scoped, tag = 'scoped memory for tpu_custom_call.1']
    #allocation5 [shape = 'u8[16384]{0}', space=vmem, size = 0x4000, scoped, tag = 'input window, operand 4, single buffered']
    #allocation6 [shape = 's32[1]{0}', space=sflag, size = 0x4, scoped, tag = 'scoped memory for tpu_custom_call.1']
    #allocation7 [shape = 'u8[16384]{0}', space=vmem, size = 0x4000, scoped, tag = 'input window, operand 5, single buffered']
    #allocation8 [shape = 'u8[16384]{0}', space=vmem, size = 0x4000, scoped, tag = 'input window, operand 6, single buffered']
    #allocation9 [shape = 's32[1]{0}', space=sflag, size = 0x4, scoped, tag = 'scoped memory for tpu_custom_call.1']
    #allocation10 [shape = 'u8[32768]{0}', space=vmem, size = 0x8000, scoped, tag = 'input window, operand 7, single buffered']
    #allocation11 [shape = 'u8[32768]{0}', space=vmem, size = 0x8000, scoped, tag = 'output window, operand 0, single buffered']
    %13 = vsyncpa [#allocation3], 0
    %14 = vsyncpa [#allocation6], 0
    %15 = vsyncpa [#allocation9], 0
    %16 = vsyncpa [#allocation4], 0
    // Predicated region
    $region2: #{tpu_custom_call.1} parent=1 // pred_check
      _
    $region3: #{tpu_custom_call.1} parent=1 // pred_check_branch
      %18 = sbr.rel (0) target = $region5
    $region4: #{tpu_custom_call.1} parent=1 // pred_region
      _
    $region5: #{tpu_custom_call.1} parent=1 // pred_fallthru
      _
    // Predicated region
    $region6: #{tpu_custom_call.1} parent=1 // pred_check
      _
    $region7: #{tpu_custom_call.1} parent=1 // pred_check_branch
      %20 = sbr.rel (0) target = $region9
    $region8: #{tpu_custom_call.1} parent=1 // pred_region
      _
    $region9: #{tpu_custom_call.1} parent=1 // pred_fallthru
      _
    // Predicated region
    $region10: #{tpu_custom_call.1} parent=1 // pred_check
      _
    $region11: #{tpu_custom_call.1} parent=1 // pred_check_branch
      %22 = sbr.rel (0) target = $region13
    $region12: #{tpu_custom_call.1} parent=1 // pred_region
      _
    $region13: #{tpu_custom_call.1} parent=1 // pred_fallthru
      _
    // Predicated region
    $region14: #{tpu_custom_call.1} parent=1 // pred_check
      _
    $region15: #{tpu_custom_call.1} parent=1 // pred_check_branch
      %24 = sbr.rel (0) target = $region17
    $region16: #{tpu_custom_call.1} parent=1 // pred_region
      %s26 = ssub.s32 1024, 1024
      %27 = vsyncadd [#allocation3], %s26
      %s28 = sshll.u32 [#allocation2], 4
      %s29 = int_to_ptr.vmem [resolvable:$true] %s28
      %34 = dma.hbm_to_vmem [thread:$0]  %s3, 1024, %s29, [#allocation3], 128, 128, 8
    $region17: #{tpu_custom_call.1} parent=1 // pred_fallthru
      _
    // Predicated region
    $region18: #{tpu_custom_call.1} parent=1 // pred_check
      _
    $region19: #{tpu_custom_call.1} parent=1 // pred_check_branch
      %36 = sbr.rel (0) target = $region21
    $region20: #{tpu_custom_call.1} parent=1 // pred_region
      %s38 = ssub.s32 512, 512
      %39 = vsyncadd [#allocation6], %s38
      %s40 = sshll.u32 [#allocation5], 4
      %s41 = int_to_ptr.vmem [resolvable:$true] %s40
      %46 = dma.hbm_to_vmem [thread:$0]  %s4, 512, %s41, [#allocation6], 128, 128, 8
    $region21: #{tpu_custom_call.1} parent=1 // pred_fallthru
      _
    // Predicated region
    $region22: #{tpu_custom_call.1} parent=1 // pred_check
      _
    $region23: #{tpu_custom_call.1} parent=1 // pred_check_branch
      %48 = sbr.rel (0) target = $region25
    $region24: #{tpu_custom_call.1} parent=1 // pred_region
      %s50 = ssub.s32 512, 512
      %51 = vsyncadd [#allocation6], %s50
      %s52 = sshll.u32 [#allocation7], 4
      %s53 = int_to_ptr.vmem [resolvable:$true] %s52
      %58 = dma.hbm_to_vmem [thread:$0]  %s5, 512, %s53, [#allocation6], 128, 128, 8
    $region25: #{tpu_custom_call.1} parent=1 // pred_fallthru
      _
    // Predicated region
    $region26: #{tpu_custom_call.1} parent=1 // pred_check
      _
    $region27: #{tpu_custom_call.1} parent=1 // pred_check_branch
      %60 = sbr.rel (0) target = $region29
    $region28: #{tpu_custom_call.1} parent=1 // pred_region
      %s62 = ssub.s32 512, 512
      %63 = vsyncadd [#allocation9], %s62
      %s64 = sshll.u32 [#allocation8], 4
      %s65 = int_to_ptr.vmem [resolvable:$true] %s64
      %70 = dma.hbm_to_vmem [thread:$0]  %s6, 512, %s65, [#allocation9], 128, 128, 8
    $region29: #{tpu_custom_call.1} parent=1 // pred_fallthru
      _
    // Predicated region
    $region30: #{tpu_custom_call.1} parent=1 // pred_check
      _
    $region31: #{tpu_custom_call.1} parent=1 // pred_check_branch
      %72 = sbr.rel (0) target = $region33
    $region32: #{tpu_custom_call.1} parent=1 // pred_region
      %s74 = ssub.s32 1024, 1024
      %75 = vsyncadd [#allocation9], %s74
      %s76 = sshll.u32 [#allocation10], 4
      %s77 = int_to_ptr.vmem [resolvable:$true] %s76
      %82 = dma.hbm_to_vmem [thread:$0]  %s7, 1024, %s77, [#allocation9], 128, 128, 8
    $region33: #{tpu_custom_call.1} parent=1 // pred_fallthru
      _
    // Predicated region
    $region34: #{tpu_custom_call.1} parent=1 // pred_check
      _
    $region35: #{tpu_custom_call.1} parent=1 // pred_check_branch
      %84 = sbr.rel (0) target = $region37
    $region36: #{tpu_custom_call.1} parent=1 // pred_region
      %85 = dma.done [#allocation3], 1024
    $region37: #{tpu_custom_call.1} parent=1 // pred_fallthru
      _
    // Predicated region
    $region38: #{tpu_custom_call.1} parent=1 // pred_check
      _
    $region39: #{tpu_custom_call.1} parent=1 // pred_check_branch
      %87 = sbr.rel (0) target = $region41
    $region40: #{tpu_custom_call.1} parent=1 // pred_region
      %88 = dma.done [#allocation6], 512
    $region41: #{tpu_custom_call.1} parent=1 // pred_fallthru
      _
    // Predicated region
    $region42: #{tpu_custom_call.1} parent=1 // pred_check
      _
    $region43: #{tpu_custom_call.1} parent=1 // pred_check_branch
      %90 = sbr.rel (0) target = $region45
    $region44: #{tpu_custom_call.1} parent=1 // pred_region
      %91 = dma.done [#allocation6], 512
    $region45: #{tpu_custom_call.1} parent=1 // pred_fallthru
      _
    // Predicated region
    $region46: #{tpu_custom_call.1} parent=1 // pred_check
      _
    $region47: #{tpu_custom_call.1} parent=1 // pred_check_branch
      %93 = sbr.rel (0) target = $region49
    $region48: #{tpu_custom_call.1} parent=1 // pred_region
      %94 = dma.done [#allocation9], 512
    $region49: #{tpu_custom_call.1} parent=1 // pred_fallthru
      _
    // Predicated region
    $region50: #{tpu_custom_call.1} parent=1 // pred_check
      _
    $region51: #{tpu_custom_call.1} parent=1 // pred_check_branch
      %96 = sbr.rel (0) target = $region53
    $region52: #{tpu_custom_call.1} parent=1 // pred_region
      %97 = dma.done [#allocation9], 1024
    $region53: #{tpu_custom_call.1} parent=1 // pred_fallthru
      _
    %v98 = vld [vmem:[#allocation7] sm:$0xff]
    %v99 = vld [vmem:[#allocation7 + $0x8] sm:$0xff]
    %v100 = vld [vmem:[#allocation7 + $0x10] sm:$0xff]
    %v101 = vld [vmem:[#allocation7 + $0x18] sm:$0xff]
    %v102 = vld [vmem:[#allocation8] sm:$0xff]
    %v103 = vld [vmem:[#allocation8 + $0x8] sm:$0xff]
    %v104 = vld [vmem:[#allocation8 + $0x10] sm:$0xff]
    %v105 = vld [vmem:[#allocation8 + $0x18] sm:$0xff]
    %v106 = vld [vmem:[#allocation10] sm:$0xff]
    %v107 = vld [vmem:[#allocation10 + $0x8] sm:$0xff]
    %v108 = vld [vmem:[#allocation10 + $0x10] sm:$0xff]
    %v109 = vld [vmem:[#allocation10 + $0x18] sm:$0xff]
    %v110 = vld [vmem:[#allocation10 + $0x20] sm:$0xff]
    %v111 = vld [vmem:[#allocation10 + $0x28] sm:$0xff]
    %v112 = vld [vmem:[#allocation10 + $0x30] sm:$0xff]
    %v113 = vld [vmem:[#allocation10 + $0x38] sm:$0xff]
    %v114 = vld [vmem:[#allocation5] sm:$0xff]
    %v115 = vld [vmem:[#allocation5 + $0x8] sm:$0xff]
    %v116 = vld [vmem:[#allocation5 + $0x10] sm:$0xff]
    %v117 = vld [vmem:[#allocation5 + $0x18] sm:$0xff]
    %v118 = vmul.f32 %v98, %v102
    %v119 = vmul.f32 %v99, %v103
    %v120 = vmul.f32 %v100, %v104
    %v121 = vmul.f32 %v101, %v105
    %v122 = vmul.f32 %v98, %v98
    %v123 = vmul.f32 %v99, %v99
    %v124 = vmul.f32 %v100, %v100
    %v125 = vmul.f32 %v101, %v101
    %v126 = vld [vmem:[%s0] sm:$0xff]
    %v127 = vld [vmem:[%s0 + $0x8] sm:$0xff]
    %v128 = vld [vmem:[%s0 + $0x10] sm:$0xff]
    %v129 = vld [vmem:[%s0 + $0x18] sm:$0xff]
    %v130 = vld [vmem:[%s0 + $0x20] sm:$0xff]
    %v131 = vld [vmem:[%s0 + $0x28] sm:$0xff]
    %v132 = vld [vmem:[%s0 + $0x30] sm:$0xff]
    %v133 = vld [vmem:[%s0 + $0x38] sm:$0xff]
    %v134 = vld [vmem:[%s0 + $0x40] sm:$0xff]
    %v135 = vld [vmem:[%s0 + $0x48] sm:$0xff]
    %v136 = vld [vmem:[%s0 + $0x50] sm:$0xff]
    %v137 = vld [vmem:[%s0 + $0x58] sm:$0xff]
    %v138 = vld [vmem:[%s0 + $0x60] sm:$0xff]
    %v139 = vld [vmem:[%s0 + $0x68] sm:$0xff]
    %v140 = vld [vmem:[%s0 + $0x70] sm:$0xff]
    %v141 = vld [vmem:[%s0 + $0x78] sm:$0xff]
    %v142 = vld [vmem:[%s1] sm:$0xff]
    %v143 = vld [vmem:[%s1 + $0x8] sm:$0xff]
    %v144 = vld [vmem:[%s1 + $0x10] sm:$0xff]
    %v145 = vld [vmem:[%s1 + $0x18] sm:$0xff]
    %v146 = vld [vmem:[%s1 + $0x20] sm:$0xff]
    %v147 = vld [vmem:[%s1 + $0x28] sm:$0xff]
    %v148 = vld [vmem:[%s1 + $0x30] sm:$0xff]
    %v149 = vld [vmem:[%s1 + $0x38] sm:$0xff]
    %vm150 = vcmask 523264
    %v152 = vsel %vm150, %v98, 0
    %v155 = vsel %vm150, %v99, 0
    %v158 = vsel %vm150, %v100, 0
    %v161 = vsel %vm150, %v101, 0
    %v164 = vsel %vm150, %v102, 0
    %v167 = vsel %vm150, %v103, 0
    %v170 = vsel %vm150, %v104, 0
    %v173 = vsel %vm150, %v105, 0
    %v176 = vsel %vm150, %v118, 0
    %v179 = vsel %vm150, %v119, 0
    %v182 = vsel %vm150, %v120, 0
    %v185 = vsel %vm150, %v121, 0
    %v188 = vsel %vm150, %v122, 0
    %v191 = vsel %vm150, %v123, 0
    %v194 = vsel %vm150, %v124, 0
    %v197 = vsel %vm150, %v125, 0
    %199 = vmatprep.subr.mxu0 0.0
    %200 = vmatpush1.msra.mxu0 %v142
    %201 = vmatprep.subr.mxu0 0.0
    %202 = vmatpush1.msra.mxu0 %v143
    %203 = vmatprep.subr.mxu0 0.0
    %204 = vmatpush1.msra.mxu0 %v144
    %205 = vmatprep.subr.mxu0 0.0
    %206 = vmatpush1.msra.mxu0 %v145
    %207 = vmatprep.subr.mxu0 0.0
    %208 = vmatpush1.msra.mxu0 %v146
    %209 = vmatprep.subr.mxu0 0.0
    %210 = vmatpush1.msra.mxu0 %v147
    %211 = vmatprep.subr.mxu0 0.0
    %212 = vmatpush1.msra.mxu0 %v148
    %213 = vmatprep.subr.mxu0 0.0
    %214 = vmatpush1.msra.mxu0 %v149
    %215 = vmatprep.subr.mxu0 0.0
    %216 = vmatpush1.msra.mxu0 0.0
    %217 = vmatprep.subr.mxu0 0.0
    %218 = vmatpush1.msra.mxu0 0.0
    %219 = vmatprep.subr.mxu0 0.0
    %220 = vmatpush1.msra.mxu0 0.0
    %221 = vmatprep.subr.mxu0 0.0
    %222 = vmatpush1.msra.mxu0 0.0
    %223 = vmatprep.subr.mxu0 0.0
    %224 = vmatpush1.msra.mxu0 0.0
    %225 = vmatprep.subr.mxu0 0.0
    %226 = vmatpush1.msra.mxu0 0.0
    %227 = vmatprep.subr.mxu0 0.0
    %228 = vmatpush1.msra.mxu0 0.0
    %229 = vmatprep.subr.mxu0 0.0
    %230 = vmatpush1.msra.mxu0 0.0
    %231 = vmatprep.subr.mxu0 0.0
    %232 = vmatpush1.msra.mxu0 0.0
    %233 = vmatprep.subr.mxu0 0.0
    %234 = vmatpush1.msra.mxu0 0.0
    %235 = vmatprep.subr.mxu0 0.0
    %236 = vmatpush1.msra.mxu0 0.0
    %237 = vmatprep.subr.mxu0 0.0
    %238 = vmatpush1.msra.mxu0 0.0
    %239 = vmatprep.subr.mxu0 0.0
    %240 = vmatpush1.msra.mxu0 0.0
    %241 = vmatprep.subr.mxu0 0.0
    %242 = vmatpush1.msra.mxu0 0.0
    %243 = vmatprep.subr.mxu0 0.0
    %244 = vmatpush1.msra.mxu0 0.0
    %245 = vmatprep.subr.mxu0 0.0
    %246 = vmatpush1.msra.mxu0 0.0
    %247 = vmatprep.subr.mxu0 0.0
    %248 = vmatpush1.msra.mxu0 0.0
    %249 = vmatprep.subr.mxu0 0.0
    %250 = vmatpush1.msra.mxu0 0.0
    %251 = vmatprep.subr.mxu0 0.0
    %252 = vmatpush1.msra.mxu0 0.0
    %253 = vmatprep.subr.mxu0 0.0
    %254 = vmatpush1.msra.mxu0 0.0
    %255 = vmatprep.subr.mxu0 0.0
    %256 = vmatpush1.msra.mxu0 0.0
    %257 = vmatprep.subr.mxu0 0.0
    %258 = vmatpush1.msra.mxu0 0.0
    %259 = vmatprep.subr.mxu0 0.0
    %260 = vmatpush1.msra.mxu0 0.0
    %261 = vmatprep.subr.mxu0 0.0
    %262 = vmatpush1.msra.mxu0 0.0
    %263 = vmatprep.mubr.f32.mxu0 0.0
    %264 = vmatmul.mubr.f32.gmra.mrb[0].mxu0 %v152
    %v265 = vpop.f32.mrb[0].mxu0
    %v266 = vadd.f32 0.0, %v265
    %v267 = vpop.f32.mrb[0].mxu0
    %268 = vmatprep.mubr.f32.mxu0 0.0
    %269 = vmatmul.mubr.f32.gmra.mrb[0].mxu0 %v155
    %v270 = vpop.f32.mrb[0].mxu0
    %v271 = vadd.f32 0.0, %v270
    %v272 = vpop.f32.mrb[0].mxu0
    %273 = vmatprep.mubr.f32.mxu0 0.0
    %274 = vmatmul.mubr.f32.gmra.mrb[0].mxu0 %v158
    %v275 = vpop.f32.mrb[0].mxu0
    %v276 = vadd.f32 0.0, %v275
    %v277 = vpop.f32.mrb[0].mxu0
    %278 = vmatprep.mubr.f32.mxu0 0.0
    %279 = vmatmul.mubr.f32.gmra.mrb[0].mxu0 %v161
    %v280 = vpop.f32.mrb[0].mxu0
    %v281 = vadd.f32 0.0, %v280
    %v282 = vpop.f32.mrb[0].mxu0
    %283 = vmatprep.mubr.f32.mxu0 0.0
    %284 = vmatmul.mubr.f32.gmra.mrb[0].mxu0 %v164
    %v285 = vpop.f32.mrb[0].mxu0
    %v286 = vadd.f32 0.0, %v285
    %v287 = vpop.f32.mrb[0].mxu0
    %288 = vmatprep.mubr.f32.mxu0 0.0
    %289 = vmatmul.mubr.f32.gmra.mrb[0].mxu0 %v167
    %v290 = vpop.f32.mrb[0].mxu0
    %v291 = vadd.f32 0.0, %v290
    %v292 = vpop.f32.mrb[0].mxu0
    %293 = vmatprep.mubr.f32.mxu0 0.0
    %294 = vmatmul.mubr.f32.gmra.mrb[0].mxu0 %v170
    %v295 = vpop.f32.mrb[0].mxu0
    %v296 = vadd.f32 0.0, %v295
    %v297 = vpop.f32.mrb[0].mxu0
    %298 = vmatprep.mubr.f32.mxu0 0.0
    %299 = vmatmul.mubr.f32.gmra.mrb[0].mxu0 %v173
    %v300 = vpop.f32.mrb[0].mxu0
    %v301 = vadd.f32 0.0, %v300
    %v302 = vpop.f32.mrb[0].mxu0
    %303 = vmatprep.mubr.f32.mxu0 0.0
    %304 = vmatmul.mubr.f32.gmra.mrb[0].mxu0 %v176
    %v305 = vpop.f32.mrb[0].mxu0
    %v306 = vadd.f32 0.0, %v305
    %v307 = vpop.f32.mrb[0].mxu0
    %308 = vmatprep.mubr.f32.mxu0 0.0
    %309 = vmatmul.mubr.f32.gmra.mrb[0].mxu0 %v179
    %v310 = vpop.f32.mrb[0].mxu0
    %v311 = vadd.f32 0.0, %v310
    %v312 = vpop.f32.mrb[0].mxu0
    %313 = vmatprep.mubr.f32.mxu0 0.0
    %314 = vmatmul.mubr.f32.gmra.mrb[0].mxu0 %v182
    %v315 = vpop.f32.mrb[0].mxu0
    %v316 = vadd.f32 0.0, %v315
    %v317 = vpop.f32.mrb[0].mxu0
    %318 = vmatprep.mubr.f32.mxu0 0.0
    %319 = vmatmul.mubr.f32.gmra.mrb[0].mxu0 %v185
    %v320 = vpop.f32.mrb[0].mxu0
    %v321 = vadd.f32 0.0, %v320
    %v322 = vpop.f32.mrb[0].mxu0
    %323 = vmatprep.mubr.f32.mxu0 0.0
    %324 = vmatmul.mubr.f32.gmra.mrb[0].mxu0 %v188
    %v325 = vpop.f32.mrb[0].mxu0
    %v326 = vadd.f32 0.0, %v325
    %v327 = vpop.f32.mrb[0].mxu0
    %328 = vmatprep.mubr.f32.mxu0 0.0
    %329 = vmatmul.mubr.f32.gmra.mrb[0].mxu0 %v191
    %v330 = vpop.f32.mrb[0].mxu0
    %v331 = vadd.f32 0.0, %v330
    %v332 = vpop.f32.mrb[0].mxu0
    %333 = vmatprep.mubr.f32.mxu0 0.0
    %334 = vmatmul.mubr.f32.gmra.mrb[0].mxu0 %v194
    %v335 = vpop.f32.mrb[0].mxu0
    %v336 = vadd.f32 0.0, %v335
    %v337 = vpop.f32.mrb[0].mxu0
    %338 = vmatprep.mubr.f32.mxu0 0.0
    %339 = vmatmul.mubr.f32.gmra.mrb[0].mxu0 %v197
    %v340 = vpop.f32.mrb[0].mxu0
    %v341 = vadd.f32 0.0, %v340
    %v342 = vpop.f32.mrb[0].mxu0
    %343 = vdwg.mxu0
    %344 = vmatprep.subr.mxu0 0.0
    %345 = vmatpush1.msra.mxu0 %v266
    %346 = vmatprep.subr.mxu0 0.0
    %347 = vmatpush1.msra.mxu0 %v271
    %348 = vmatprep.subr.mxu0 0.0
    %349 = vmatpush1.msra.mxu0 %v276
    %350 = vmatprep.subr.mxu0 0.0
    %351 = vmatpush1.msra.mxu0 %v281
    %352 = vmatprep.subr.mxu0 0.0
    %353 = vmatpush1.msra.mxu0 %v286
    %354 = vmatprep.subr.mxu0 0.0
    %355 = vmatpush1.msra.mxu0 %v291
    %356 = vmatprep.subr.mxu0 0.0
    %357 = vmatpush1.msra.mxu0 %v296
    %358 = vmatprep.subr.mxu0 0.0
    %359 = vmatpush1.msra.mxu0 %v301
    %360 = vmatprep.subr.mxu0 0.0
    %361 = vmatpush1.msra.mxu0 %v306
    %362 = vmatprep.subr.mxu0 0.0
    %363 = vmatpush1.msra.mxu0 %v311
    %364 = vmatprep.subr.mxu0 0.0
    %365 = vmatpush1.msra.mxu0 %v316
    %366 = vmatprep.subr.mxu0 0.0
    %367 = vmatpush1.msra.mxu0 %v321
    %368 = vmatprep.subr.mxu0 0.0
    %369 = vmatpush1.msra.mxu0 %v326
    %370 = vmatprep.subr.mxu0 0.0
    %371 = vmatpush1.msra.mxu0 %v331
    %372 = vmatprep.subr.mxu0 0.0
    %373 = vmatpush1.msra.mxu0 %v336
    %374 = vmatprep.subr.mxu0 0.0
    %375 = vmatpush1.msra.mxu0 %v341
    %376 = vmatprep.subr.mxu0 0.0
    %377 = vmatpush1.msra.mxu0 0.0
    %378 = vmatprep.subr.mxu0 0.0
    %379 = vmatpush1.msra.mxu0 0.0
    %380 = vmatprep.subr.mxu0 0.0
    %381 = vmatpush1.msra.mxu0 0.0
    %382 = vmatprep.subr.mxu0 0.0
    %383 = vmatpush1.msra.mxu0 0.0
    %384 = vmatprep.subr.mxu0 0.0
    %385 = vmatpush1.msra.mxu0 0.0
    %386 = vmatprep.subr.mxu0 0.0
    %387 = vmatpush1.msra.mxu0 0.0
    %388 = vmatprep.subr.mxu0 0.0
    %389 = vmatpush1.msra.mxu0 0.0
    %390 = vmatprep.subr.mxu0 0.0
    %391 = vmatpush1.msra.mxu0 0.0
    %392 = vmatprep.subr.mxu0 0.0
    %393 = vmatpush1.msra.mxu0 0.0
    %394 = vmatprep.subr.mxu0 0.0
    %395 = vmatpush1.msra.mxu0 0.0
    %396 = vmatprep.subr.mxu0 0.0
    %397 = vmatpush1.msra.mxu0 0.0
    %398 = vmatprep.subr.mxu0 0.0
    %399 = vmatpush1.msra.mxu0 0.0
    %400 = vmatprep.subr.mxu0 0.0
    %401 = vmatpush1.msra.mxu0 0.0
    %402 = vmatprep.subr.mxu0 0.0
    %403 = vmatpush1.msra.mxu0 0.0
    %404 = vmatprep.subr.mxu0 0.0
    %405 = vmatpush1.msra.mxu0 0.0
    %406 = vmatprep.subr.mxu0 0.0
    %407 = vmatpush1.msra.mxu0 0.0
    %408 = vmatprep.mubr.f32.mxu0 0.0
    %409 = vmatmul.mubr.f32.gmra.mrb[0].mxu0 %v126
    %v410 = vpop.f32.mrb[0].mxu0
    %v411 = vadd.f32 0.0, %v410
    %v412 = vpop.f32.mrb[0].mxu0
    %413 = vmatprep.mubr.f32.mxu0 0.0
    %414 = vmatmul.mubr.f32.gmra.mrb[0].mxu0 %v127
    %v415 = vpop.f32.mrb[0].mxu0
    %v416 = vadd.f32 0.0, %v415
    %v417 = vpop.f32.mrb[0].mxu0
    %418 = vmatprep.mubr.f32.mxu0 0.0
    %419 = vmatmul.mubr.f32.gmra.mrb[0].mxu0 %v128
    %v420 = vpop.f32.mrb[0].mxu0
    %v421 = vadd.f32 0.0, %v420
    %v422 = vpop.f32.mrb[0].mxu0
    %423 = vmatprep.mubr.f32.mxu0 0.0
    %424 = vmatmul.mubr.f32.gmra.mrb[0].mxu0 %v129
    %v425 = vpop.f32.mrb[0].mxu0
    %v426 = vadd.f32 0.0, %v425
    %v427 = vpop.f32.mrb[0].mxu0
    %428 = vmatprep.mubr.f32.mxu0 0.0
    %429 = vmatmul.mubr.f32.gmra.mrb[0].mxu0 %v130
    %v430 = vpop.f32.mrb[0].mxu0
    %v431 = vadd.f32 0.0, %v430
    %v432 = vpop.f32.mrb[0].mxu0
    %433 = vmatprep.mubr.f32.mxu0 0.0
    %434 = vmatmul.mubr.f32.gmra.mrb[0].mxu0 %v131
    %v435 = vpop.f32.mrb[0].mxu0
    %v436 = vadd.f32 0.0, %v435
    %v437 = vpop.f32.mrb[0].mxu0
    %438 = vmatprep.mubr.f32.mxu0 0.0
    %439 = vmatmul.mubr.f32.gmra.mrb[0].mxu0 %v132
    %v440 = vpop.f32.mrb[0].mxu0
    %v441 = vadd.f32 0.0, %v440
    %v442 = vpop.f32.mrb[0].mxu0
    %443 = vmatprep.mubr.f32.mxu0 0.0
    %444 = vmatmul.mubr.f32.gmra.mrb[0].mxu0 %v133
    %v445 = vpop.f32.mrb[0].mxu0
    %v446 = vadd.f32 0.0, %v445
    %v447 = vpop.f32.mrb[0].mxu0
    %448 = vmatprep.mubr.f32.mxu0 0.0
    %449 = vmatmul.mubr.f32.gmra.mrb[0].mxu0 %v134
    %v450 = vpop.f32.mrb[0].mxu0
    %v451 = vadd.f32 0.0, %v450
    %v452 = vpop.f32.mrb[0].mxu0
    %453 = vmatprep.mubr.f32.mxu0 0.0
    %454 = vmatmul.mubr.f32.gmra.mrb[0].mxu0 %v135
    %v455 = vpop.f32.mrb[0].mxu0
    %v456 = vadd.f32 0.0, %v455
    %v457 = vpop.f32.mrb[0].mxu0
    %458 = vmatprep.mubr.f32.mxu0 0.0
    %459 = vmatmul.mubr.f32.gmra.mrb[0].mxu0 %v136
    %v460 = vpop.f32.mrb[0].mxu0
    %v461 = vadd.f32 0.0, %v460
    %v462 = vpop.f32.mrb[0].mxu0
    %463 = vmatprep.mubr.f32.mxu0 0.0
    %464 = vmatmul.mubr.f32.gmra.mrb[0].mxu0 %v137
    %v465 = vpop.f32.mrb[0].mxu0
    %v466 = vadd.f32 0.0, %v465
    %v467 = vpop.f32.mrb[0].mxu0
    %468 = vmatprep.mubr.f32.mxu0 0.0
    %469 = vmatmul.mubr.f32.gmra.mrb[0].mxu0 %v138
    %v470 = vpop.f32.mrb[0].mxu0
    %v471 = vadd.f32 0.0, %v470
    %v472 = vpop.f32.mrb[0].mxu0
    %473 = vmatprep.mubr.f32.mxu0 0.0
    %474 = vmatmul.mubr.f32.gmra.mrb[0].mxu0 %v139
    %v475 = vpop.f32.mrb[0].mxu0
    %v476 = vadd.f32 0.0, %v475
    %v477 = vpop.f32.mrb[0].mxu0
    %478 = vmatprep.mubr.f32.mxu0 0.0
    %479 = vmatmul.mubr.f32.gmra.mrb[0].mxu0 %v140
    %v480 = vpop.f32.mrb[0].mxu0
    %v481 = vadd.f32 0.0, %v480
    %v482 = vpop.f32.mrb[0].mxu0
    %483 = vmatprep.mubr.f32.mxu0 0.0
    %484 = vmatmul.mubr.f32.gmra.mrb[0].mxu0 %v141
    %v485 = vpop.f32.mrb[0].mxu0
    %v486 = vadd.f32 0.0, %v485
    %v487 = vpop.f32.mrb[0].mxu0
    %488 = vdwg.mxu0
    %v489 = vmul.f32 %v411, %v114
    %v490 = vmul.f32 %v416, %v115
    %v491 = vmul.f32 %v421, %v116
    %v492 = vmul.f32 %v426, %v117
    %v493 = vmul.f32 %v431, %v114
    %v494 = vmul.f32 %v436, %v115
    %v495 = vmul.f32 %v441, %v116
    %v496 = vmul.f32 %v446, %v117
    %v497 = vmul.f32 %v451, %v114
    %v498 = vmul.f32 %v456, %v115
    %v499 = vmul.f32 %v461, %v116
    %v500 = vmul.f32 %v466, %v117
    %v501 = vmul.f32 %v489, %v493
    %v502 = vmul.f32 %v490, %v494
    %v503 = vmul.f32 %v491, %v495
    %v504 = vmul.f32 %v492, %v496
    %v505 = vsub.f32 %v497, %v501
    %v506 = vsub.f32 %v498, %v502
    %v507 = vsub.f32 %v499, %v503
    %v508 = vsub.f32 %v500, %v504
    %v509 = vmul.f32 %v471, %v114
    %v510 = vmul.f32 %v476, %v115
    %v511 = vmul.f32 %v481, %v116
    %v512 = vmul.f32 %v486, %v117
    %v513 = vmul.f32 %v489, %v489
    %v514 = vmul.f32 %v490, %v490
    %v515 = vmul.f32 %v491, %v491
    %v516 = vmul.f32 %v492, %v492
    %v517 = vsub.f32 %v509, %v513
    %v518 = vsub.f32 %v510, %v514
    %v519 = vsub.f32 %v511, %v515
    %v520 = vsub.f32 %v512, %v516
    %v521 = vadd.f32 %v517, 1e-08
    %v522 = vadd.f32 %v518, 1e-08
    %v523 = vadd.f32 %v519, 1e-08
    %v524 = vadd.f32 %v520, 1e-08
    %v525 = vrcp.pop %v521
    %v526 = vrcp.pop %v522
    %v527 = vrcp.pop %v523
    %v528 = vrcp.pop %v524
    %v529 = vmul.f32 %v521, %v525
    %v530 = vmul.f32 %v522, %v526
    %v531 = vmul.f32 %v523, %v527
    %v532 = vmul.f32 %v524, %v528
    %v533 = vsub.f32 2.0, %v529
    %v534 = vsub.f32 2.0, %v530
    %v535 = vsub.f32 2.0, %v531
    %v536 = vsub.f32 2.0, %v532
    %v537 = vmul.f32 %v525, %v533
    %v538 = vmul.f32 %v526, %v534
    %v539 = vmul.f32 %v527, %v535
    %v540 = vmul.f32 %v528, %v536
    %v541 = vmul.f32 %v505, %v537
    %v542 = vmul.f32 %v506, %v538
    %v543 = vmul.f32 %v507, %v539
    %v544 = vmul.f32 %v508, %v540
    %v545 = vmul.f32 %v541, %v489
    %v546 = vmul.f32 %v542, %v490
    %v547 = vmul.f32 %v543, %v491
    %v548 = vmul.f32 %v544, %v492
    %v549 = vsub.f32 %v493, %v545
    %v550 = vsub.f32 %v494, %v546
    %v551 = vsub.f32 %v495, %v547
    %v552 = vsub.f32 %v496, %v548
    %v553 = vld [vmem:[%s2] sm:$0xff]
    %v554 = vld [vmem:[%s2 + $0x8] sm:$0xff]
    %v555 = vld [vmem:[%s2 + $0x10] sm:$0xff]
    %v556 = vld [vmem:[%s2 + $0x18] sm:$0xff]
    %v557 = vld [vmem:[%s2 + $0x20] sm:$0xff]
    %v558 = vld [vmem:[%s2 + $0x28] sm:$0xff]
    %v559 = vld [vmem:[%s2 + $0x30] sm:$0xff]
    %v560 = vld [vmem:[%s2 + $0x38] sm:$0xff]
    %v561 = vld [vmem:[%s2 + $0x40] sm:$0xff]
    %v562 = vld [vmem:[%s2 + $0x48] sm:$0xff]
    %v563 = vld [vmem:[%s2 + $0x50] sm:$0xff]
    %v564 = vld [vmem:[%s2 + $0x58] sm:$0xff]
    %v565 = vld [vmem:[%s2 + $0x60] sm:$0xff]
    %v566 = vld [vmem:[%s2 + $0x68] sm:$0xff]
    %v567 = vld [vmem:[%s2 + $0x70] sm:$0xff]
    %v568 = vld [vmem:[%s2 + $0x78] sm:$0xff]
    %v569 = vld [vmem:[#allocation2] sm:$0xff]
    %v570 = vld [vmem:[#allocation2 + $0x8] sm:$0xff]
    %v571 = vld [vmem:[#allocation2 + $0x10] sm:$0xff]
    %v572 = vld [vmem:[#allocation2 + $0x18] sm:$0xff]
    %v573 = vld [vmem:[#allocation2 + $0x20] sm:$0xff]
    %v574 = vld [vmem:[#allocation2 + $0x28] sm:$0xff]
    %v575 = vld [vmem:[#allocation2 + $0x30] sm:$0xff]
    %v576 = vld [vmem:[#allocation2 + $0x38] sm:$0xff]
    %v578 = vsel %vm150, %v541, 0
    %v581 = vsel %vm150, %v542, 0
    %v584 = vsel %vm150, %v543, 0
    %v587 = vsel %vm150, %v544, 0
    %v590 = vsel %vm150, %v549, 0
    %v593 = vsel %vm150, %v550, 0
    %v596 = vsel %vm150, %v551, 0
    %v599 = vsel %vm150, %v552, 0
    %601 = vmatprep.subr.mxu0 0.0
    %602 = vmatpush1.msra.mxu0 %v569
    %603 = vmatprep.subr.mxu0 0.0
    %604 = vmatpush1.msra.mxu0 %v570
    %605 = vmatprep.subr.mxu0 0.0
    %606 = vmatpush1.msra.mxu0 %v571
    %607 = vmatprep.subr.mxu0 0.0
    %608 = vmatpush1.msra.mxu0 %v572
    %609 = vmatprep.subr.mxu0 0.0
    %610 = vmatpush1.msra.mxu0 %v573
    %611 = vmatprep.subr.mxu0 0.0
    %612 = vmatpush1.msra.mxu0 %v574
    %613 = vmatprep.subr.mxu0 0.0
    %614 = vmatpush1.msra.mxu0 %v575
    %615 = vmatprep.subr.mxu0 0.0
    %616 = vmatpush1.msra.mxu0 %v576
    %617 = vmatprep.subr.mxu0 0.0
    %618 = vmatpush1.msra.mxu0 0.0
    %619 = vmatprep.subr.mxu0 0.0
    %620 = vmatpush1.msra.mxu0 0.0
    %621 = vmatprep.subr.mxu0 0.0
    %622 = vmatpush1.msra.mxu0 0.0
    %623 = vmatprep.subr.mxu0 0.0
    %624 = vmatpush1.msra.mxu0 0.0
    %625 = vmatprep.subr.mxu0 0.0
    %626 = vmatpush1.msra.mxu0 0.0
    %627 = vmatprep.subr.mxu0 0.0
    %628 = vmatpush1.msra.mxu0 0.0
    %629 = vmatprep.subr.mxu0 0.0
    %630 = vmatpush1.msra.mxu0 0.0
    %631 = vmatprep.subr.mxu0 0.0
    %632 = vmatpush1.msra.mxu0 0.0
    %633 = vmatprep.subr.mxu0 0.0
    %634 = vmatpush1.msra.mxu0 0.0
    %635 = vmatprep.subr.mxu0 0.0
    %636 = vmatpush1.msra.mxu0 0.0
    %637 = vmatprep.subr.mxu0 0.0
    %638 = vmatpush1.msra.mxu0 0.0
    %639 = vmatprep.subr.mxu0 0.0
    %640 = vmatpush1.msra.mxu0 0.0
    %641 = vmatprep.subr.mxu0 0.0
    %642 = vmatpush1.msra.mxu0 0.0
    %643 = vmatprep.subr.mxu0 0.0
    %644 = vmatpush1.msra.mxu0 0.0
    %645 = vmatprep.subr.mxu0 0.0
    %646 = vmatpush1.msra.mxu0 0.0
    %647 = vmatprep.subr.mxu0 0.0
    %648 = vmatpush1.msra.mxu0 0.0
    %649 = vmatprep.subr.mxu0 0.0
    %650 = vmatpush1.msra.mxu0 0.0
    %651 = vmatprep.subr.mxu0 0.0
    %652 = vmatpush1.msra.mxu0 0.0
    %653 = vmatprep.subr.mxu0 0.0
    %654 = vmatpush1.msra.mxu0 0.0
    %655 = vmatprep.subr.mxu0 0.0
    %656 = vmatpush1.msra.mxu0 0.0
    %657 = vmatprep.subr.mxu0 0.0
    %658 = vmatpush1.msra.mxu0 0.0
    %659 = vmatprep.subr.mxu0 0.0
    %660 = vmatpush1.msra.mxu0 0.0
    %661 = vmatprep.subr.mxu0 0.0
    %662 = vmatpush1.msra.mxu0 0.0
    %663 = vmatprep.subr.mxu0 0.0
    %664 = vmatpush1.msra.mxu0 0.0
    %665 = vmatprep.mubr.f32.mxu0 0.0
    %666 = vmatmul.mubr.f32.gmra.mrb[0].mxu0 %v578
    %v667 = vpop.f32.mrb[0].mxu0
    %v668 = vadd.f32 0.0, %v667
    %v669 = vpop.f32.mrb[0].mxu0
    %670 = vmatprep.mubr.f32.mxu0 0.0
    %671 = vmatmul.mubr.f32.gmra.mrb[0].mxu0 %v581
    %v672 = vpop.f32.mrb[0].mxu0
    %v673 = vadd.f32 0.0, %v672
    %v674 = vpop.f32.mrb[0].mxu0
    %675 = vmatprep.mubr.f32.mxu0 0.0
    %676 = vmatmul.mubr.f32.gmra.mrb[0].mxu0 %v584
    %v677 = vpop.f32.mrb[0].mxu0
    %v678 = vadd.f32 0.0, %v677
    %v679 = vpop.f32.mrb[0].mxu0
    %680 = vmatprep.mubr.f32.mxu0 0.0
    %681 = vmatmul.mubr.f32.gmra.mrb[0].mxu0 %v587
    %v682 = vpop.f32.mrb[0].mxu0
    %v683 = vadd.f32 0.0, %v682
    %v684 = vpop.f32.mrb[0].mxu0
    %685 = vmatprep.mubr.f32.mxu0 0.0
    %686 = vmatmul.mubr.f32.gmra.mrb[0].mxu0 %v590
    %v687 = vpop.f32.mrb[0].mxu0
    %v688 = vadd.f32 0.0, %v687
    %v689 = vpop.f32.mrb[0].mxu0
    %690 = vmatprep.mubr.f32.mxu0 0.0
    %691 = vmatmul.mubr.f32.gmra.mrb[0].mxu0 %v593
    %v692 = vpop.f32.mrb[0].mxu0
    %v693 = vadd.f32 0.0, %v692
    %v694 = vpop.f32.mrb[0].mxu0
    %695 = vmatprep.mubr.f32.mxu0 0.0
    %696 = vmatmul.mubr.f32.gmra.mrb[0].mxu0 %v596
    %v697 = vpop.f32.mrb[0].mxu0
    %v698 = vadd.f32 0.0, %v697
    %v699 = vpop.f32.mrb[0].mxu0
    %700 = vmatprep.mubr.f32.mxu0 0.0
    %701 = vmatmul.mubr.f32.gmra.mrb[0].mxu0 %v599
    %v702 = vpop.f32.mrb[0].mxu0
    %v703 = vadd.f32 0.0, %v702
    %v704 = vpop.f32.mrb[0].mxu0
    %705 = vdwg.mxu0
    %v707 = vsel %vm150, %v553, 0
    %v710 = vsel %vm150, %v554, 0
    %v713 = vsel %vm150, %v555, 0
    %v716 = vsel %vm150, %v556, 0
    %v719 = vsel %vm150, %v557, 0
    %v722 = vsel %vm150, %v558, 0
    %v725 = vsel %vm150, %v559, 0
    %v728 = vsel %vm150, %v560, 0
    %v731 = vsel %vm150, %v561, 0
    %v734 = vsel %vm150, %v562, 0
    %v737 = vsel %vm150, %v563, 0
    %v740 = vsel %vm150, %v564, 0
    %v743 = vsel %vm150, %v565, 0
    %v746 = vsel %vm150, %v566, 0
    %v749 = vsel %vm150, %v567, 0
    %v752 = vsel %vm150, %v568, 0
    %754 = vmatprep.subr.mxu0 0.0
    %755 = vmatpush1.msra.mxu0 %v668
    %756 = vmatprep.subr.mxu0 0.0
    %757 = vmatpush1.msra.mxu0 %v673
    %758 = vmatprep.subr.mxu0 0.0
    %759 = vmatpush1.msra.mxu0 %v678
    %760 = vmatprep.subr.mxu0 0.0
    %761 = vmatpush1.msra.mxu0 %v683
    %762 = vmatprep.subr.mxu0 0.0
    %763 = vmatpush1.msra.mxu0 %v688
    %764 = vmatprep.subr.mxu0 0.0
    %765 = vmatpush1.msra.mxu0 %v693
    %766 = vmatprep.subr.mxu0 0.0
    %767 = vmatpush1.msra.mxu0 %v698
    %768 = vmatprep.subr.mxu0 0.0
    %769 = vmatpush1.msra.mxu0 %v703
    %770 = vmatprep.subr.mxu0 0.0
    %771 = vmatpush1.msra.mxu0 0.0
    %772 = vmatprep.subr.mxu0 0.0
    %773 = vmatpush1.msra.mxu0 0.0
    %774 = vmatprep.subr.mxu0 0.0
    %775 = vmatpush1.msra.mxu0 0.0
    %776 = vmatprep.subr.mxu0 0.0
    %777 = vmatpush1.msra.mxu0 0.0
    %778 = vmatprep.subr.mxu0 0.0
    %779 = vmatpush1.msra.mxu0 0.0
    %780 = vmatprep.subr.mxu0 0.0
    %781 = vmatpush1.msra.mxu0 0.0
    %782 = vmatprep.subr.mxu0 0.0
    %783 = vmatpush1.msra.mxu0 0.0
    %784 = vmatprep.subr.mxu0 0.0
    %785 = vmatpush1.msra.mxu0 0.0
    %786 = vmatprep.subr.mxu0 0.0
    %787 = vmatpush1.msra.mxu0 0.0
    %788 = vmatprep.subr.mxu0 0.0
    %789 = vmatpush1.msra.mxu0 0.0
    %790 = vmatprep.subr.mxu0 0.0
    %791 = vmatpush1.msra.mxu0 0.0
    %792 = vmatprep.subr.mxu0 0.0
    %793 = vmatpush1.msra.mxu0 0.0
    %794 = vmatprep.subr.mxu0 0.0
    %795 = vmatpush1.msra.mxu0 0.0
    %796 = vmatprep.subr.mxu0 0.0
    %797 = vmatpush1.msra.mxu0 0.0
    %798 = vmatprep.subr.mxu0 0.0
    %799 = vmatpush1.msra.mxu0 0.0
    %800 = vmatprep.subr.mxu0 0.0
    %801 = vmatpush1.msra.mxu0 0.0
    %802 = vmatprep.subr.mxu0 0.0
    %803 = vmatpush1.msra.mxu0 0.0
    %804 = vmatprep.subr.mxu0 0.0
    %805 = vmatpush1.msra.mxu0 0.0
    %806 = vmatprep.subr.mxu0 0.0
    %807 = vmatpush1.msra.mxu0 0.0
    %808 = vmatprep.subr.mxu0 0.0
    %809 = vmatpush1.msra.mxu0 0.0
    %810 = vmatprep.subr.mxu0 0.0
    %811 = vmatpush1.msra.mxu0 0.0
    %812 = vmatprep.subr.mxu0 0.0
    %813 = vmatpush1.msra.mxu0 0.0
    %814 = vmatprep.subr.mxu0 0.0
    %815 = vmatpush1.msra.mxu0 0.0
    %816 = vmatprep.subr.mxu0 0.0
    %817 = vmatpush1.msra.mxu0 0.0
    %818 = vmatprep.mubr.f32.mxu0 0.0
    %819 = vmatmul.mubr.f32.gmra.mrb[0].mxu0 %v707
    %v820 = vpop.f32.mrb[0].mxu0
    %v821 = vadd.f32 0.0, %v820
    %v822 = vpop.f32.mrb[0].mxu0
    %823 = vmatprep.mubr.f32.mxu0 0.0
    %824 = vmatmul.mubr.f32.gmra.mrb[0].mxu0 %v710
    %v825 = vpop.f32.mrb[0].mxu0
    %v826 = vadd.f32 0.0, %v825
    %v827 = vpop.f32.mrb[0].mxu0
    %828 = vmatprep.mubr.f32.mxu0 0.0
    %829 = vmatmul.mubr.f32.gmra.mrb[0].mxu0 %v713
    %v830 = vpop.f32.mrb[0].mxu0
    %v831 = vadd.f32 0.0, %v830
    %v832 = vpop.f32.mrb[0].mxu0
    %833 = vmatprep.mubr.f32.mxu0 0.0
    %834 = vmatmul.mubr.f32.gmra.mrb[0].mxu0 %v716
    %v835 = vpop.f32.mrb[0].mxu0
    %v836 = vadd.f32 0.0, %v835
    %v837 = vpop.f32.mrb[0].mxu0
    %838 = vmatprep.mubr.f32.mxu0 0.0
    %839 = vmatmul.mubr.f32.gmra.mrb[0].mxu0 %v719
    %v840 = vpop.f32.mrb[0].mxu0
    %v841 = vadd.f32 0.0, %v840
    %v842 = vpop.f32.mrb[0].mxu0
    %843 = vmatprep.mubr.f32.mxu0 0.0
    %844 = vmatmul.mubr.f32.gmra.mrb[0].mxu0 %v722
    %v845 = vpop.f32.mrb[0].mxu0
    %v846 = vadd.f32 0.0, %v845
    %v847 = vpop.f32.mrb[0].mxu0
    %848 = vmatprep.mubr.f32.mxu0 0.0
    %849 = vmatmul.mubr.f32.gmra.mrb[0].mxu0 %v725
    %v850 = vpop.f32.mrb[0].mxu0
    %v851 = vadd.f32 0.0, %v850
    %v852 = vpop.f32.mrb[0].mxu0
    %853 = vmatprep.mubr.f32.mxu0 0.0
    %854 = vmatmul.mubr.f32.gmra.mrb[0].mxu0 %v728
    %v855 = vpop.f32.mrb[0].mxu0
    %v856 = vadd.f32 0.0, %v855
    %v857 = vpop.f32.mrb[0].mxu0
    %858 = vmatprep.mubr.f32.mxu0 0.0
    %859 = vmatmul.mubr.f32.gmra.mrb[0].mxu0 %v731
    %v860 = vpop.f32.mrb[0].mxu0
    %v861 = vadd.f32 0.0, %v860
    %v862 = vpop.f32.mrb[0].mxu0
    %863 = vmatprep.mubr.f32.mxu0 0.0
    %864 = vmatmul.mubr.f32.gmra.mrb[0].mxu0 %v734
    %v865 = vpop.f32.mrb[0].mxu0
    %v866 = vadd.f32 0.0, %v865
    %v867 = vpop.f32.mrb[0].mxu0
    %868 = vmatprep.mubr.f32.mxu0 0.0
    %869 = vmatmul.mubr.f32.gmra.mrb[0].mxu0 %v737
    %v870 = vpop.f32.mrb[0].mxu0
    %v871 = vadd.f32 0.0, %v870
    %v872 = vpop.f32.mrb[0].mxu0
    %873 = vmatprep.mubr.f32.mxu0 0.0
    %874 = vmatmul.mubr.f32.gmra.mrb[0].mxu0 %v740
    %v875 = vpop.f32.mrb[0].mxu0
    %v876 = vadd.f32 0.0, %v875
    %v877 = vpop.f32.mrb[0].mxu0
    %878 = vmatprep.mubr.f32.mxu0 0.0
    %879 = vmatmul.mubr.f32.gmra.mrb[0].mxu0 %v743
    %v880 = vpop.f32.mrb[0].mxu0
    %v881 = vadd.f32 0.0, %v880
    %v882 = vpop.f32.mrb[0].mxu0
    %883 = vmatprep.mubr.f32.mxu0 0.0
    %884 = vmatmul.mubr.f32.gmra.mrb[0].mxu0 %v746
    %v885 = vpop.f32.mrb[0].mxu0
    %v886 = vadd.f32 0.0, %v885
    %v887 = vpop.f32.mrb[0].mxu0
    %888 = vmatprep.mubr.f32.mxu0 0.0
    %889 = vmatmul.mubr.f32.gmra.mrb[0].mxu0 %v749
    %v890 = vpop.f32.mrb[0].mxu0
    %v891 = vadd.f32 0.0, %v890
    %v892 = vpop.f32.mrb[0].mxu0
    %893 = vmatprep.mubr.f32.mxu0 0.0
    %894 = vmatmul.mubr.f32.gmra.mrb[0].mxu0 %v752
    %v895 = vpop.f32.mrb[0].mxu0
    %v896 = vadd.f32 0.0, %v895
    %v897 = vpop.f32.mrb[0].mxu0
    %898 = vdwg.mxu0
    %v899 = vmul.f32 %v821, %v106
    %v900 = vmul.f32 %v826, %v107
    %v901 = vmul.f32 %v831, %v108
    %v902 = vmul.f32 %v836, %v109
    %v903 = vmul.f32 %v841, %v110
    %v904 = vmul.f32 %v846, %v111
    %v905 = vmul.f32 %v851, %v112
    %v906 = vmul.f32 %v856, %v113
    %v907 = vadd.f32 %v899, %v861
    %v908 = vadd.f32 %v900, %v866
    %v909 = vadd.f32 %v901, %v871
    %v910 = vadd.f32 %v902, %v876
    %v911 = vadd.f32 %v903, %v881
    %v912 = vadd.f32 %v904, %v886
    %v913 = vadd.f32 %v905, %v891
    %v914 = vadd.f32 %v906, %v896
    %915 = vst [vmem:[#allocation11] sm:$0xff] %v907
    %916 = vst [vmem:[#allocation11 + $0x8] sm:$0xff] %v908
    %917 = vst [vmem:[#allocation11 + $0x10] sm:$0xff] %v909
    %918 = vst [vmem:[#allocation11 + $0x18] sm:$0xff] %v910
    %919 = vst [vmem:[#allocation11 + $0x20] sm:$0xff] %v911
    %920 = vst [vmem:[#allocation11 + $0x28] sm:$0xff] %v912
    %921 = vst [vmem:[#allocation11 + $0x30] sm:$0xff] %v913
    %922 = vst [vmem:[#allocation11 + $0x38] sm:$0xff] %v914
    // Predicated region
    $region54: #{tpu_custom_call.1} parent=1 // pred_check
      _
    $region55: #{tpu_custom_call.1} parent=1 // pred_check_branch
      %924 = sbr.rel (0) target = $region57
    $region56: #{tpu_custom_call.1} parent=1 // pred_region
      %s926 = ssub.s32 1024, 1024
      %927 = vsyncadd [#allocation4], %s926
      %s928 = sshll.u32 [#allocation11], 4
      %s929 = int_to_ptr.vmem [resolvable:$true] %s928
      %934 = dma.vmem_to_hbm [thread:$0]  %s929, 1024, %s8, [#allocation4], 128, 128, 8
    $region57: #{tpu_custom_call.1} parent=1 // pred_fallthru
      _
    // Predicated region
    $region58: #{tpu_custom_call.1} parent=1 // pred_check
      _
    $region59: #{tpu_custom_call.1} parent=1 // pred_check_branch
      %936 = sbr.rel (0) target = $region61
    $region60: #{tpu_custom_call.1} parent=1 // pred_region
      %937 = dma.done [#allocation4], 1024
    $region61: #{tpu_custom_call.1} parent=1 // pred_fallthru
      _
    %938 = vsyncpa [#allocation3], 1
    %939 = vsyncpa [#allocation6], 1
    %940 = vsyncpa [#allocation9], 1
    %941 = vsyncpa [#allocation4], 1

</llo_original>
